<compile_context>
chip_gen: v6e
topology: v6e:2x2x1
jax: 0.10.0
libtpu: 0.0.40
codegen_flags: <defaults>
</compile_context>

<pallas_src>
import functools

import jax
import jax.numpy as jnp
import numpy as np
from jax.experimental import pallas as pl
from jax.experimental.pallas import tpu as pltpu


def _ravel_dma_kernel(rows_per_chunk, x_hbm, o_hbm, sem):
    """Copy one row-chunk of the flattened (B, flat) view straight HBM -> HBM."""
    i = pl.program_id(0)
    start = pl.multiple_of(i * rows_per_chunk, rows_per_chunk)
    cp = pltpu.make_async_copy(
        x_hbm.at[pl.ds(start, rows_per_chunk)],
        o_hbm.at[pl.ds(start, rows_per_chunk)],
        sem,
    )
    cp.start()
    cp.wait()


def ravel(x):
    """Pallas equivalent of torch `x.view(x.shape[0], -1)`."""
    b = x.shape[0]
    flat = int(np.prod(x.shape[1:])) if x.ndim > 1 else 1

    # Metadata-only flatten in the wrapper (free); the kernel only ever sees a
    # contiguous (B, flat) HBM buffer, never vregs.
    x2 = jnp.reshape(x, (b, flat))

    # Two chunks (when B divides evenly) so the parallel grid axis can shard
    # the DMA issue across both TensorCores on v7x; otherwise one big DMA.
    n_chunks = 2 if (b >= 2 and b % 2 == 0) else 1
    rows_per_chunk = b // n_chunks

    kernel = functools.partial(_ravel_dma_kernel, rows_per_chunk)

    return pl.pallas_call(
        kernel,
        out_shape=jax.ShapeDtypeStruct((b, flat), x.dtype),
        grid=(n_chunks,),
        in_specs=[pl.BlockSpec(memory_space=pl.ANY)],
        out_specs=pl.BlockSpec(memory_space=pl.ANY),
        scratch_shapes=[pltpu.SemaphoreType.DMA(())],
        compiler_params=pltpu.CompilerParams(
            dimension_semantics=("parallel",),
        ),
    )(x2)


if __name__ == "__main__":
    key = jax.random.PRNGKey(0)
    x = jax.random.normal(key, (2, 4, 16, 16), dtype=jnp.float32)

    # Reference (plain JAX equivalent of torch's view(B, -1)).
    ref = np.asarray(jnp.reshape(x, (x.shape[0], -1)))

    y = ravel(x)
    y = jax.block_until_ready(y)

    assert y.shape == (2, 4 * 16 * 16), y.shape
    assert y.dtype == x.dtype
    np.testing.assert_array_equal(np.asarray(y), ref)

    print("KERNEL_OK")
</pallas_src>

<mosaic_0001>
module attributes {stable_mosaic.version = 11 : i64} {
  func.func @_ravel_dma_kernel(%arg0: i32, %arg1: memref<2x1024xf32, #tpu.memory_space<any>>, %arg2: memref<2x1024xf32, #tpu.memory_space<any>>, %arg3: memref<!tpu.dma_semaphore, #tpu.memory_space<semaphore_mem>>) attributes {dimension_semantics = [#tpu.dimension_semantics<parallel>], iteration_bounds = array<i64: 2>, scalar_prefetch = 0 : i64, scratch_operands = 1 : i64, tpu.core_type = #tpu.core_type<tc>, window_params = [{}, {}]} {
    %c1_i32 = arith.constant 1 : i32
    %0 = arith.muli %arg0, %c1_i32 : i32
    %1 = tpu.assume_multiple %0, 1 : i32
    %c0_i32 = arith.constant 0 : i32
    %2 = tpu.memref_slice %arg1[%1, %c0_i32] : memref<2x1024xf32, #tpu.memory_space<any>> -> memref<1x1024xf32, #tpu.memory_space<any>>
    %c0_i32_0 = arith.constant 0 : i32
    %3 = tpu.memref_slice %arg2[%1, %c0_i32_0] : memref<2x1024xf32, #tpu.memory_space<any>> -> memref<1x1024xf32, #tpu.memory_space<any>>
    tpu.enqueue_dma source(%2 : memref<1x1024xf32, #tpu.memory_space<any>>) target(%3 : memref<1x1024xf32, #tpu.memory_space<any>>) target_semaphore(%arg3 : memref<!tpu.dma_semaphore, #tpu.memory_space<semaphore_mem>>)
    %c0_i32_1 = arith.constant 0 : i32
    %4 = tpu.memref_slice %arg1[%1, %c0_i32_1] : memref<2x1024xf32, #tpu.memory_space<any>> -> memref<1x1024xf32, #tpu.memory_space<any>>
    %c0_i32_2 = arith.constant 0 : i32
    %5 = tpu.memref_slice %arg2[%1, %c0_i32_2] : memref<2x1024xf32, #tpu.memory_space<any>> -> memref<1x1024xf32, #tpu.memory_space<any>>
    tpu.wait_dma2 semaphore(%arg3 : memref<!tpu.dma_semaphore, #tpu.memory_space<semaphore_mem>>) src(%4 : memref<1x1024xf32, #tpu.memory_space<any>>) dst(%5 : memref<1x1024xf32, #tpu.memory_space<any>>)
    return
  }
}

</mosaic_0001>

<llo_original>
// kernel: tpu_custom_call.1
$region0: #{tpu_custom_call.1}
  #allocation0 [shape = 'u32[]', space=smem, size = 0x4, offset = 0x4, fixed_abs, tag = 'smem constant byte address 0x4 - core index']
  #allocation1 [shape = 'u32[144,128]{1,0:T(1,128)}', space=vmem, size = 0x12000, scoped, tag = 'internal scratch']
  #allocation2 [shape = 's32[1]{0}', space=sflag, size = 0x4, scoped, tag = 'scratch operand']
  #allocation3 [shape = 's32[]', space=sflag, size = 0x4, offset = 0, fixed_abs, tag = 'sflag constant byte address 0x0 - dummy sync flag']
  %s0 = inlined_call_operand.hbm [shape: f32[2,1024], index: 0, kind: input, shape index: {}]
  %s1 = inlined_call_operand.hbm [shape: f32[2,1024], index: 1, kind: output, shape index: {}]
  %s2 = sld [smem:[#allocation0]]
  $region9: #{tpu_custom_call.1} parent=0
    _
  %s4 = ssub.s32 1, %s2
  %s5 = scalar_select 0, %s4, %s2
  loop: start=0, step=1, limit=2
  $region2: #{tpu_custom_call.1} parent=0 // loop_pre_header
    _
  $region3: #{tpu_custom_call.1} parent=0 // loop_header
    %s7 = sphi 0, %s11
    %p8 = scmp.ge.s32.totalorder %s7, 2
  $region4: #{tpu_custom_call.1} parent=0 // loop_header_branch
    %10 = sbr.rel (%p8) target = $region8
  $region5: #{tpu_custom_call.1} parent=0 // loop_body
    #allocation4 [shape = 'u32[3]{0}', space=smem, size = 0xc, scoped, tag = 'DMA stride descriptor']
    %s12 = sadd.s32 %s7, 1
    %s13 = sshrl.u32 %s7, 1
    %s14 = sand.u32 %s7, 1
    %s15 = smul.u32 %s13, 16
    %s16 = sadd.s32 %s14, %s15
    %s17 = smul.addr %s16, 16
    %s18 = scalar_lea.hbm %s0, %s17
    %s19 = smul.addr %s16, 16
    %s20 = scalar_lea.hbm %s1, %s19
    %s22 = sshll.u32 1, 14
    %s23 = sxor.u32 4294967295, %s22
    %27 = sst [smem:[#allocation4]] 32
    %s28 = scalar_lea.smem [#allocation4], 1
    %29 = sst [smem:[%s28]] 32
    %s30 = scalar_lea.smem [#allocation4], 2
    %31 = sst [smem:[%s30]] 1
    %33 = dma.general %s18, 128, %s20, [#allocation2], 131072, [#allocation4], 0, 0
    %s34 = smul.u32 1, 8
    %s35 = sshll.u32 %s34, 4
    %36 = dma.done [#allocation2], %s35
  $region6: #{tpu_custom_call.1} parent=0 // loop_footer
    %s11 = sadd.s32 1, %s7
  $region7: #{tpu_custom_call.1} parent=0 // loop_footer_branch
    %6 = sbr.rel target = $region3
  $region8: #{tpu_custom_call.1} parent=0 // loop_exit
    _
  %37 = vsyncmov [#allocation2]
  %s38 = vpop.sfrf %37
  %p39 = scmp.eq.s32.totalorder %s38, 0
  %p40 = pneg %p39
  %42 = shalt.err (%p40)

</llo_original>
